<compile_context>
chip_gen: v5e
topology: v5e:2x2
jax: 0.10.0
libtpu: 0.0.40
codegen_flags: <defaults>
</compile_context>

<pallas_src>
import functools
import math

import jax
import jax.numpy as jnp
from jax.experimental import pallas as pl
from jax.experimental.pallas import tpu as pltpu


def _layernorm_kernel(alpha_ref, bias_ref, x_ref, o_ref, *, epsilon, d_model):
    # x_ref: (TILE_N, D) f32 tile, D on the lane axis.
    x = x_ref[...]
    mean = jnp.mean(x, axis=-1, keepdims=True)               # XLU reduce
    centered = x - mean
    # torch.Tensor.std() defaults to the unbiased estimator (Bessel, /(D-1)).
    var = jnp.sum(centered * centered, axis=-1, keepdims=True) * (1.0 / (d_model - 1))
    std = jnp.sqrt(var)
    alpha = alpha_ref[0]                                      # scalar from SMEM
    bias = bias_ref[0]
    # One divide per row (TILE_N,1), then broadcast multiply-add per element.
    inv = alpha / (std + epsilon)
    o_ref[...] = centered * inv + bias


def _pick_row_tile(n_rows, d_model, itemsize, max_tile=1024, vmem_budget=4 << 20):
    """Largest multiple-of-8 tile that divides n_rows and fits the VMEM budget."""
    # One input tile + one output tile, each double-buffered by the pipeline.
    max_by_vmem = max(8, vmem_budget // (4 * d_model * itemsize))
    cand = max_tile
    while cand >= 8:
        if cand <= n_rows and cand <= max_by_vmem and n_rows % cand == 0:
            return cand
        cand //= 2
    # Fall back to the full row count (block_shape == full array dim is legal
    # even when not a multiple of 8).
    return n_rows


def layer_normalization(x, alpha, bias, epsilon=1e-6, tile_n=1024):
    """x: (..., D) float32, alpha/bias: (1,) float32 -> same shape as x."""
    orig_shape = x.shape
    D = orig_shape[-1]
    N = math.prod(orig_shape[:-1])
    x2 = x.reshape(N, D)

    itemsize = jnp.dtype(x.dtype).itemsize
    tn = _pick_row_tile(N, D, itemsize, max_tile=tile_n)
    grid = (N // tn,)

    out = pl.pallas_call(
        functools.partial(_layernorm_kernel, epsilon=epsilon, d_model=D),
        out_shape=jax.ShapeDtypeStruct((N, D), x.dtype),
        grid_spec=pltpu.PrefetchScalarGridSpec(
            num_scalar_prefetch=0,
            grid=grid,
            in_specs=[
                pl.BlockSpec(memory_space=pltpu.MemorySpace.SMEM),  # alpha (1,)
                pl.BlockSpec(memory_space=pltpu.MemorySpace.SMEM),  # bias  (1,)
                pl.BlockSpec((tn, D), lambda i: (i, 0)),            # x tile
            ],
            out_specs=pl.BlockSpec((tn, D), lambda i: (i, 0)),
        ),
        compiler_params=pltpu.CompilerParams(
            dimension_semantics=("parallel",),   # row-tiles are independent
        ),
        cost_estimate=pl.CostEstimate(
            flops=8 * N * D,
            transcendentals=2 * N,               # sqrt + reciprocal per row
            bytes_accessed=2 * N * D * itemsize + 2 * itemsize,
        ),
    )(alpha, bias, x2)

    return out.reshape(orig_shape)


if __name__ == "__main__":
    batch, seq, d_model = 2, 8, 128
    epsilon = 1e-6

    key = jax.random.PRNGKey(0)
    x = jax.random.normal(key, (batch, seq, d_model), dtype=jnp.float32)

    # nn.Parameter init from the module: alpha = ones(1), bias = zeros(1).
    alpha = jnp.ones((1,), dtype=jnp.float32)
    bias = jnp.zeros((1,), dtype=jnp.float32)

    out = layer_normalization(x, alpha, bias, epsilon=epsilon)
    out = jax.block_until_ready(out)

    # Reference (plain JAX): torch.std is unbiased -> ddof=1.
    mean = x.mean(axis=-1, keepdims=True)
    std = jnp.std(x, axis=-1, keepdims=True, ddof=1)
    ref = alpha[0] * (x - mean) / (std + epsilon) + bias[0]

    assert out.shape == x.shape
    assert jnp.allclose(out, ref, atol=1e-5, rtol=1e-5), "mismatch vs reference"

    print("KERNEL_OK")
</pallas_src>

<mosaic_0001>
module attributes {stable_mosaic.version = 11 : i64} {
  func.func @_layernorm_kernel(%arg0: i32, %arg1: memref<1xf32, #tpu.memory_space<smem>>, %arg2: memref<1xf32, #tpu.memory_space<smem>>, %arg3: memref<16x128xf32, #tpu.memory_space<vmem>>, %arg4: memref<16x128xf32, #tpu.memory_space<vmem>>) attributes {dimension_semantics = [#tpu.dimension_semantics<parallel>], iteration_bounds = array<i64: 1>, scalar_prefetch = 0 : i64, scratch_operands = 0 : i64, tpu.core_type = #tpu.core_type<tc>, window_params = [{transform_indices = @transform_0, window_bounds = array<i64: 1>}, {transform_indices = @transform_1, window_bounds = array<i64: 1>}, {transform_indices = @transform_2, window_bounds = array<i64: 16, 128>}, {transform_indices = @transform_3, window_bounds = array<i64: 16, 128>}]} {
    %c0 = arith.constant 0 : index
    %c0_0 = arith.constant 0 : index
    %0 = vector.load %arg3[%c0, %c0_0] : memref<16x128xf32, #tpu.memory_space<vmem>>, vector<16x128xf32>
    %cst = arith.constant dense<0.000000e+00> : vector<16xf32>
    %1 = vector.multi_reduction <add>, %0, %cst [1] : vector<16x128xf32> to vector<16xf32>
    %2 = vector.shape_cast %1 : vector<16xf32> to vector<16x1xf32>
    %cst_1 = arith.constant 1.280000e+02 : f32
    %3 = vector.broadcast %cst_1 : f32 to vector<16x1xf32>
    %4 = arith.divf %2, %3 : vector<16x1xf32>
    %5 = vector.broadcast %4 : vector<16x1xf32> to vector<16x128xf32>
    %6 = arith.subf %0, %5 : vector<16x128xf32>
    %7 = arith.mulf %6, %6 : vector<16x128xf32>
    %cst_2 = arith.constant dense<0.000000e+00> : vector<16xf32>
    %8 = vector.multi_reduction <add>, %7, %cst_2 [1] : vector<16x128xf32> to vector<16xf32>
    %9 = vector.shape_cast %8 : vector<16xf32> to vector<16x1xf32>
    %cst_3 = arith.constant 0.00787401571 : f32
    %10 = vector.broadcast %cst_3 : f32 to vector<16x1xf32>
    %11 = arith.mulf %9, %10 : vector<16x1xf32>
    %12 = math.sqrt %11 : vector<16x1xf32>
    %c0_4 = arith.constant 0 : index
    %13 = memref.load %arg1[%c0_4] : memref<1xf32, #tpu.memory_space<smem>>
    %c0_5 = arith.constant 0 : index
    %14 = memref.load %arg2[%c0_5] : memref<1xf32, #tpu.memory_space<smem>>
    %cst_6 = arith.constant 9.99999997E-7 : f32
    %15 = vector.broadcast %cst_6 : f32 to vector<16x1xf32>
    %16 = arith.addf %12, %15 : vector<16x1xf32>
    %17 = vector.broadcast %13 : f32 to vector<16x1xf32>
    %18 = arith.divf %17, %16 : vector<16x1xf32>
    %19 = vector.broadcast %18 : vector<16x1xf32> to vector<16x128xf32>
    %20 = arith.mulf %6, %19 : vector<16x128xf32>
    %21 = vector.broadcast %14 : f32 to vector<16x128xf32>
    %22 = arith.addf %20, %21 : vector<16x128xf32>
    %c0_7 = arith.constant 0 : index
    %c0_8 = arith.constant 0 : index
    %23 = vector.load %arg4[%c0_7, %c0_8] : memref<16x128xf32, #tpu.memory_space<vmem>>, vector<16x128xf32>
    tpu.vector_store %arg4[%c0_7, %c0_8], %22 {strides = array<i32>} : memref<16x128xf32, #tpu.memory_space<vmem>>, vector<16x128xf32>,
    return
  }
  func.func @transform_0(%arg0: i32) -> i32 {
    %c0_i32 = arith.constant 0 : i32
    %c0_i32_0 = arith.constant 0 : i32
    return %c0_i32 : i32
  }
  func.func @transform_1(%arg0: i32) -> i32 {
    %c0_i32 = arith.constant 0 : i32
    %c0_i32_0 = arith.constant 0 : i32
    return %c0_i32 : i32
  }
  func.func @transform_2(%arg0: i32) -> (i32, i32) {
    %c0_i32 = arith.constant 0 : i32
    %c0_i32_0 = arith.constant 0 : i32
    return %arg0, %c0_i32 : i32, i32
  }
  func.func @transform_3(%arg0: i32) -> (i32, i32) {
    %c0_i32 = arith.constant 0 : i32
    %c0_i32_0 = arith.constant 0 : i32
    return %arg0, %c0_i32 : i32, i32
  }
}

</mosaic_0001>

<llo_original>
// kernel: tpu_custom_call.1
$region0: #{tpu_custom_call.1}
  #allocation0 [shape = 'u32[]', space=smem, size = 0x4, offset = 0x4, fixed_abs, tag = 'smem constant byte address 0x4 - core index']
  #allocation1 [shape = 'u32[72,128]{1,0:T(1,128)}', space=vmem, size = 0x9000, scoped, tag = 'internal scratch']
  #allocation2 [shape = 'f32[1]{0:T(128)S(6)}', space=smem, size = 0x200, scoped, tag = 'scoped memory for tpu_custom_call.1']
  #allocation3 [shape = 'f32[1]{0:T(128)S(6)}', space=smem, size = 0x200, scoped, tag = 'scoped memory for tpu_custom_call.1']
  %s0 = inlined_call_operand.<no memory space> [shape: f32[1], index: 0, kind: input, shape index: {}]
  %s1 = inlined_call_operand.<no memory space> [shape: f32[1], index: 1, kind: input, shape index: {}]
  %s2 = inlined_call_operand.hbm [shape: f32[16,128], index: 2, kind: input, shape index: {}]
  %s3 = inlined_call_operand.hbm [shape: f32[16,128], index: 3, kind: output, shape index: {}]
  %s4 = sld [smem:[#allocation0]]
  $region26: #{tpu_custom_call.1} parent=0
    _
  %s6 = ssub.s32 1, %s4
  %s7 = scalar_select 0, %s6, %s4
  %8 = sst [smem:[#allocation2]] %s0
  %9 = sst [smem:[#allocation3]] %s1
  $region1: #{tpu_custom_call.1} parent=0
    #allocation4 [shape = 'u8[8192]{0}', space=vmem, size = 0x2000, scoped, tag = 'input window, operand 2, single buffered']
    #allocation5 [shape = 's32[1]{0}', space=sflag, size = 0x4, scoped, tag = 'scoped memory for tpu_custom_call.1']
    #allocation6 [shape = 's32[1]{0}', space=sflag, size = 0x4, scoped, tag = 'scoped memory for tpu_custom_call.1']
    #allocation7 [shape = 'u8[8192]{0}', space=vmem, size = 0x2000, scoped, tag = 'output window, operand 0, single buffered']
    %10 = vsyncpa [#allocation5], 0
    %11 = vsyncpa [#allocation6], 0
    // Predicated region
    $region2: #{tpu_custom_call.1} parent=1 // pred_check
      _
    $region3: #{tpu_custom_call.1} parent=1 // pred_check_branch
      %13 = sbr.rel (0) target = $region5
    $region4: #{tpu_custom_call.1} parent=1 // pred_region
      _
    $region5: #{tpu_custom_call.1} parent=1 // pred_fallthru
      _
    // Predicated region
    $region6: #{tpu_custom_call.1} parent=1 // pred_check
      _
    $region7: #{tpu_custom_call.1} parent=1 // pred_check_branch
      %15 = sbr.rel (0) target = $region9
    $region8: #{tpu_custom_call.1} parent=1 // pred_region
      _
    $region9: #{tpu_custom_call.1} parent=1 // pred_fallthru
      _
    // Predicated region
    $region10: #{tpu_custom_call.1} parent=1 // pred_check
      _
    $region11: #{tpu_custom_call.1} parent=1 // pred_check_branch
      %17 = sbr.rel (0) target = $region13
    $region12: #{tpu_custom_call.1} parent=1 // pred_region
      %19 = vsyncadd [#allocation5], 0
      %s20 = sshll.u32 %s2, 4
      %s21 = int_to_ptr.hbm [resolvable:$true] %s20
      %s22 = sshll.u32 [#allocation4], 4
      %s23 = int_to_ptr.vmem [resolvable:$true] %s22
      %28 = dma.hbm_to_vmem [thread:$0]  %s21, 256, %s23, [#allocation5], 128, 128, 8
    $region13: #{tpu_custom_call.1} parent=1 // pred_fallthru
      _
    // Predicated region
    $region14: #{tpu_custom_call.1} parent=1 // pred_check
      _
    $region15: #{tpu_custom_call.1} parent=1 // pred_check_branch
      %30 = sbr.rel (0) target = $region17
    $region16: #{tpu_custom_call.1} parent=1 // pred_region
      %32 = dma.done [#allocation5], 256
    $region17: #{tpu_custom_call.1} parent=1 // pred_fallthru
      _
    %v33 = vld [vmem:[#allocation4] sm:$0xff]
    %v34 = vld [vmem:[#allocation4 + $0x8] sm:$0xff]
    %35 = vadd.xlane.f32.xlu0 %v33
    %v36 = vpop.xlane.xlu0 %35
    %37 = vadd.xlane.f32.xlu0 %v34
    %v38 = vpop.xlane.xlu0 %37
    %v39 = vrcp.pop 128.0
    %v40 = vmul.f32 128.0, %v39
    %v41 = vsub.f32 1.0, %v40
    %v42 = vmul.f32 %v39, %v41
    %v43 = vadd.f32 %v39, %v42
    %vm44 = vweird.f32 %v39
    %v45 = vsel %vm44, %v39, %v43
    %v46 = vmul.f32 %v36, %v45
    %v47 = vmul.f32 %v38, %v45
    %v48 = vsub.f32 %v33, %v46
    %v49 = vsub.f32 %v34, %v47
    %v50 = vmul.f32 %v48, %v48
    %v51 = vmul.f32 %v49, %v49
    %52 = vadd.xlane.f32.xlu0 %v50
    %v53 = vpop.xlane.xlu0 %52
    %54 = vadd.xlane.f32.xlu0 %v51
    %v55 = vpop.xlane.xlu0 %54
    %v56 = vmul.f32 %v53, 0.007874016
    %v57 = vmul.f32 %v55, 0.007874016
    %v58 = vrsqrt.pop %v56
    %v59 = vmul.f32 %v58, %v56
    %v60 = vmul.f32 %v59, %v58
    %v61 = vmul.f32 0.5, %v60
    %v62 = vsub.f32 1.5, %v61
    %v63 = vmul.f32 %v58, %v62
    %v64 = vmul.f32 %v56, %v63
    %vm65 = vcmp.eq.f32.partialorder %v56, inf
    %v66 = vsel %vm65, %v56, %v64
    %vm67 = vcmp.eq.f32.partialorder %v56, 0.0
    %v68 = vand.u32 %v56, 2147483648
    %v69 = vsel %vm67, %v68, %v66
    %v70 = vrsqrt.pop %v57
    %v71 = vmul.f32 %v70, %v57
    %v72 = vmul.f32 %v71, %v70
    %v73 = vmul.f32 0.5, %v72
    %v74 = vsub.f32 1.5, %v73
    %v75 = vmul.f32 %v70, %v74
    %v76 = vmul.f32 %v57, %v75
    %vm77 = vcmp.eq.f32.partialorder %v57, inf
    %v78 = vsel %vm77, %v57, %v76
    %vm79 = vcmp.eq.f32.partialorder %v57, 0.0
    %v80 = vand.u32 %v57, 2147483648
    %v81 = vsel %vm79, %v80, %v78
    %s82 = sld [smem:[#allocation2]]
    %s83 = sld [smem:[#allocation3]]
    %v84 = vadd.f32 %v69, 1e-06
    %v85 = vadd.f32 %v81, 1e-06
    %v86 = vstv %s82
    %v87 = vrcp.pop %v84
    %v88 = vmul.f32 %v84, %v87
    %v89 = vsub.f32 1.0, %v88
    %v90 = vmul.f32 %v87, %v89
    %v91 = vadd.f32 %v87, %v90
    %vm92 = vweird.f32 %v84
    %vm93 = vweird.f32 %v87
    %vm94 = vmor %vm92, %vm93
    %v95 = vsel %vm94, %v87, %v91
    %v96 = vand.u32 2147483647, %v84
    %vm97 = vcmp.eq.f32.partialorder %v96, 8.507059e+37
    %v98 = vand.u32 %v84, 2147483648
    %v99 = vor.u32 1.1754944e-38, %v98
    %v100 = vsel %vm97, %v99, %v95
    %v101 = vmul.f32 %v86, %v100
    %v102 = vrcp.pop %v85
    %v103 = vmul.f32 %v85, %v102
    %v104 = vsub.f32 1.0, %v103
    %v105 = vmul.f32 %v102, %v104
    %v106 = vadd.f32 %v102, %v105
    %vm107 = vweird.f32 %v85
    %vm108 = vweird.f32 %v102
    %vm109 = vmor %vm107, %vm108
    %v110 = vsel %vm109, %v102, %v106
    %v111 = vand.u32 2147483647, %v85
    %vm112 = vcmp.eq.f32.partialorder %v111, 8.507059e+37
    %v113 = vand.u32 %v85, 2147483648
    %v114 = vor.u32 1.1754944e-38, %v113
    %v115 = vsel %vm112, %v114, %v110
    %v116 = vmul.f32 %v86, %v115
    %v117 = vmul.f32 %v48, %v101
    %v118 = vmul.f32 %v49, %v116
    %v119 = vstv %s83
    %v120 = vadd.f32 %v117, %v119
    %v121 = vadd.f32 %v118, %v119
    %122 = vst [vmem:[#allocation7] sm:$0xff] %v120
    %123 = vst [vmem:[#allocation7 + $0x8] sm:$0xff] %v121
    // Predicated region
    $region18: #{tpu_custom_call.1} parent=1 // pred_check
      _
    $region19: #{tpu_custom_call.1} parent=1 // pred_check_branch
      %125 = sbr.rel (0) target = $region21
    $region20: #{tpu_custom_call.1} parent=1 // pred_region
      %127 = vsyncadd [#allocation6], 0
      %s128 = sshll.u32 [#allocation7], 4
      %s129 = int_to_ptr.vmem [resolvable:$true] %s128
      %s130 = sshll.u32 %s3, 4
      %s131 = int_to_ptr.hbm [resolvable:$true] %s130
      %136 = dma.vmem_to_hbm [thread:$0]  %s129, 256, %s131, [#allocation6], 128, 128, 8
    $region21: #{tpu_custom_call.1} parent=1 // pred_fallthru
      _
    // Predicated region
    $region22: #{tpu_custom_call.1} parent=1 // pred_check
      _
    $region23: #{tpu_custom_call.1} parent=1 // pred_check_branch
      %138 = sbr.rel (0) target = $region25
    $region24: #{tpu_custom_call.1} parent=1 // pred_region
      %140 = dma.done [#allocation6], 256
    $region25: #{tpu_custom_call.1} parent=1 // pred_fallthru
      _
    %141 = vsyncpa [#allocation5], 1
    %142 = vsyncpa [#allocation6], 1

</llo_original>
